<compile_context>
chip_gen: v5e
topology: v5e:2x2
jax: 0.10.0
libtpu: 0.0.40
codegen_flags: <defaults>
</compile_context>

<pallas_src>
import jax
import jax.numpy as jnp
from jax.experimental import pallas as pl
from jax.experimental.pallas import tpu as pltpu

_LANE = 128
_SUBLANE = 8
_TILE_FLOOR = _SUBLANE * _LANE          # 1024 elems: minimum (8,128) tile
_DEFAULT_TILE_ROWS = 4096               # 4096*128*4B = 2 MiB per f32 block


def _round_kernel(x_ref, o_ref):
    # Pure elementwise round-half-to-even (matches torch.round).
    o_ref[...] = jnp.round(x_ref[...])


def _round_2d(x2d: jax.Array, tile_rows: int) -> jax.Array:
    rows, lane = x2d.shape
    # Small-input fast path: a single block covering the whole array.
    tile_rows = min(tile_rows, rows)
    grid = (pl.cdiv(rows, tile_rows),)
    return pl.pallas_call(
        _round_kernel,
        out_shape=jax.ShapeDtypeStruct((rows, lane), x2d.dtype),
        grid_spec=pltpu.PrefetchScalarGridSpec(
            num_scalar_prefetch=0,
            grid=grid,
            in_specs=[pl.BlockSpec((tile_rows, lane), lambda i: (i, 0))],
            out_specs=pl.BlockSpec((tile_rows, lane), lambda i: (i, 0)),
        ),
        compiler_params=pltpu.CompilerParams(
            dimension_semantics=("parallel",)),
    )(x2d)


def _base_round_impl(x: jax.Array, tile_rows: int = _DEFAULT_TILE_ROWS) -> jax.Array:
    orig_shape = x.shape
    flat = x.reshape(-1)
    n = flat.shape[0]

    # Pad only to the (8,128) tile floor; skip entirely when already aligned.
    pad = (-n) % _TILE_FLOOR
    if pad:
        flat = jnp.pad(flat, (0, pad))
    rows = (n + pad) // _LANE
    x2d = flat.reshape(rows, _LANE)

    out2d = _round_2d(x2d, tile_rows)

    out = out2d.reshape(-1)
    if pad:
        out = out[:n]
    return out.reshape(orig_shape)


@jax.custom_vjp
def base_round(x: jax.Array) -> jax.Array:
    """Straight-through round: forward == round(x), backward == identity."""
    return _base_round_impl(x)


def _base_round_fwd(x):
    return _base_round_impl(x), None


def _base_round_bwd(_, g):
    # Straight-through estimator: d/dx [x + stopgrad(round(x) - x)] == 1.
    return (g,)


base_round.defvjp(_base_round_fwd, _base_round_bwd)


if __name__ == "__main__":
    key = jax.random.PRNGKey(0)
    # Small NCHW input consistent with a conv-style tensor.
    x = jax.random.normal(key, (2, 4, 16, 16), dtype=jnp.float32) * 3.0

    y = base_round(x)
    y = jax.block_until_ready(y)

    # Forward check: value-wise equal to round(x) (round-half-to-even).
    ref = jnp.round(x)
    assert y.shape == x.shape and y.dtype == x.dtype
    assert jnp.allclose(y, ref), "mismatch with reference round"

    # Straight-through gradient check: identity backward.
    g = jax.grad(lambda v: jnp.sum(base_round(v)))(x)
    g = jax.block_until_ready(g)
    assert jnp.allclose(g, jnp.ones_like(x)), "STE gradient should be identity"

    print("KERNEL_OK")
</pallas_src>

<mosaic_0001>
module attributes {stable_mosaic.version = 11 : i64} {
  func.func @_round_kernel(%arg0: i32, %arg1: memref<16x128xf32, #tpu.memory_space<vmem>>, %arg2: memref<16x128xf32, #tpu.memory_space<vmem>>) attributes {dimension_semantics = [#tpu.dimension_semantics<parallel>], iteration_bounds = array<i64: 1>, scalar_prefetch = 0 : i64, scratch_operands = 0 : i64, tpu.core_type = #tpu.core_type<tc>, window_params = [{transform_indices = @transform_0, window_bounds = array<i64: 16, 128>}, {transform_indices = @transform_1, window_bounds = array<i64: 16, 128>}]} {
    %c0 = arith.constant 0 : index
    %c0_0 = arith.constant 0 : index
    %0 = vector.load %arg1[%c0, %c0_0] : memref<16x128xf32, #tpu.memory_space<vmem>>, vector<16x128xf32>
    %1 = math.roundeven %0 : vector<16x128xf32>
    %c0_1 = arith.constant 0 : index
    %c0_2 = arith.constant 0 : index
    %2 = vector.load %arg2[%c0_1, %c0_2] : memref<16x128xf32, #tpu.memory_space<vmem>>, vector<16x128xf32>
    tpu.vector_store %arg2[%c0_1, %c0_2], %1 {strides = array<i32>} : memref<16x128xf32, #tpu.memory_space<vmem>>, vector<16x128xf32>,
    return
  }
  func.func @transform_0(%arg0: i32) -> (i32, i32) {
    %c0_i32 = arith.constant 0 : i32
    %c0_i32_0 = arith.constant 0 : i32
    return %arg0, %c0_i32 : i32, i32
  }
  func.func @transform_1(%arg0: i32) -> (i32, i32) {
    %c0_i32 = arith.constant 0 : i32
    %c0_i32_0 = arith.constant 0 : i32
    return %arg0, %c0_i32 : i32, i32
  }
}

</mosaic_0001>

<llo_original>
// kernel: tpu_custom_call.1
$region0: #{tpu_custom_call.1}
  #allocation0 [shape = 'u32[]', space=smem, size = 0x4, offset = 0x4, fixed_abs, tag = 'smem constant byte address 0x4 - core index']
  #allocation1 [shape = 'u32[72,128]{1,0:T(1,128)}', space=vmem, size = 0x9000, scoped, tag = 'internal scratch']
  %s0 = inlined_call_operand.hbm [shape: f32[16,128], index: 0, kind: input, shape index: {}]
  %s1 = inlined_call_operand.hbm [shape: f32[16,128], index: 1, kind: output, shape index: {}]
  %s2 = sld [smem:[#allocation0]]
  $region18: #{tpu_custom_call.1} parent=0
    _
  %s4 = ssub.s32 1, %s2
  %s5 = scalar_select 0, %s4, %s2
  $region1: #{tpu_custom_call.1} parent=0
    #allocation2 [shape = 'u8[8192]{0}', space=vmem, size = 0x2000, scoped, tag = 'input window, operand 0, single buffered']
    #allocation3 [shape = 's32[1]{0}', space=sflag, size = 0x4, scoped, tag = 'scoped memory for tpu_custom_call.1']
    #allocation4 [shape = 's32[1]{0}', space=sflag, size = 0x4, scoped, tag = 'scoped memory for tpu_custom_call.1']
    #allocation5 [shape = 'u8[8192]{0}', space=vmem, size = 0x2000, scoped, tag = 'output window, operand 0, single buffered']
    %6 = vsyncpa [#allocation3], 0
    %7 = vsyncpa [#allocation4], 0
    // Predicated region
    $region2: #{tpu_custom_call.1} parent=1 // pred_check
      _
    $region3: #{tpu_custom_call.1} parent=1 // pred_check_branch
      %9 = sbr.rel (0) target = $region5
    $region4: #{tpu_custom_call.1} parent=1 // pred_region
      %11 = vsyncadd [#allocation3], 0
      %s12 = sshll.u32 %s0, 4
      %s13 = int_to_ptr.hbm [resolvable:$true] %s12
      %s14 = sshll.u32 [#allocation2], 4
      %s15 = int_to_ptr.vmem [resolvable:$true] %s14
      %20 = dma.hbm_to_vmem [thread:$0]  %s13, 256, %s15, [#allocation3], 128, 128, 8
    $region5: #{tpu_custom_call.1} parent=1 // pred_fallthru
      _
    // Predicated region
    $region6: #{tpu_custom_call.1} parent=1 // pred_check
      _
    $region7: #{tpu_custom_call.1} parent=1 // pred_check_branch
      %22 = sbr.rel (0) target = $region9
    $region8: #{tpu_custom_call.1} parent=1 // pred_region
      %24 = dma.done [#allocation3], 256
    $region9: #{tpu_custom_call.1} parent=1 // pred_fallthru
      _
    %v25 = vld [vmem:[#allocation2] sm:$0xff]
    %v26 = vld [vmem:[#allocation2 + $0x8] sm:$0xff]
    %v27 = vround.ne.pseudo %v25
    %v28 = vround.ne.pseudo %v26
    %29 = vst [vmem:[#allocation5] sm:$0xff] %v27
    %30 = vst [vmem:[#allocation5 + $0x8] sm:$0xff] %v28
    // Predicated region
    $region10: #{tpu_custom_call.1} parent=1 // pred_check
      _
    $region11: #{tpu_custom_call.1} parent=1 // pred_check_branch
      %32 = sbr.rel (0) target = $region13
    $region12: #{tpu_custom_call.1} parent=1 // pred_region
      %34 = vsyncadd [#allocation4], 0
      %s35 = sshll.u32 [#allocation5], 4
      %s36 = int_to_ptr.vmem [resolvable:$true] %s35
      %s37 = sshll.u32 %s1, 4
      %s38 = int_to_ptr.hbm [resolvable:$true] %s37
      %43 = dma.vmem_to_hbm [thread:$0]  %s36, 256, %s38, [#allocation4], 128, 128, 8
    $region13: #{tpu_custom_call.1} parent=1 // pred_fallthru
      _
    // Predicated region
    $region14: #{tpu_custom_call.1} parent=1 // pred_check
      _
    $region15: #{tpu_custom_call.1} parent=1 // pred_check_branch
      %45 = sbr.rel (0) target = $region17
    $region16: #{tpu_custom_call.1} parent=1 // pred_region
      %47 = dma.done [#allocation4], 256
    $region17: #{tpu_custom_call.1} parent=1 // pred_fallthru
      _
    %48 = vsyncpa [#allocation3], 1
    %49 = vsyncpa [#allocation4], 1

</llo_original>
